<compile_context>
chip_gen: v7x
topology: tpu7x:2x2x1
jax: 0.10.0
libtpu: 0.0.40
codegen_flags: <defaults>
</compile_context>

<pallas_src>
import jax
import jax.numpy as jnp
from jax.experimental import pallas as pl
from jax.experimental.pallas import tpu as pltpu


def _round_up(x, m):
    return (x + m - 1) // m * m


def mazenet_kernel(x_ref, w1_ref, b1_ref, w2_ref, b2_ref, w3_ref, b3_ref, o_ref):
    # One batch tile of activations against fully VMEM-resident packed weights.
    # x arrives as f32; cast to bf16 in-kernel (no wrapper-side HBM cast pass).
    x = x_ref[...].astype(w1_ref.dtype)
    # Block 1: Linear (bf16 MXU, f32 accumulation) + f32 bias + ReLU.
    h = jnp.dot(x, w1_ref[...], preferred_element_type=jnp.float32) + b1_ref[...]
    h = jnp.maximum(h, 0.0).astype(w2_ref.dtype)
    # Block 2: Linear + ReLU.
    h = jnp.dot(h, w2_ref[...], preferred_element_type=jnp.float32) + b2_ref[...]
    h = jnp.maximum(h, 0.0).astype(w3_ref.dtype)
    # Head: Linear into a lane-dense (multiple-of-128 wide) bf16 output slab.
    o = jnp.dot(h, w3_ref[...], preferred_element_type=jnp.float32) + b3_ref[...]
    o_ref[...] = o.astype(o_ref.dtype)


def prepack_params(params, *, compute_dtype=jnp.bfloat16):
    """One-time weight packing (hoisted out of the forward path).

    Weights -> bf16; hidden width and head width are zero-padded to multiples
    of 128. Biases stay f32 (added to the f32 accumulator in-kernel).
    Padded hidden columns stay exactly 0 through bias+ReLU, so the math is
    unchanged. The first matmul's K stays at feat_dim so x never needs padding.
    """
    feat_dim, act_dim = params["w3"].shape[0], params["w3"].shape[1]
    feat_pad = _round_up(feat_dim, 128)
    n_pad = _round_up(act_dim, 128)

    def pad2(a, rows, cols):
        return jnp.pad(a, ((0, rows - a.shape[0]), (0, cols - a.shape[1])))

    return {
        "w1": pad2(params["w1"].astype(compute_dtype), feat_dim, feat_pad),
        "b1": pad2(params["b1"].astype(jnp.float32), 1, feat_pad),
        "w2": pad2(params["w2"].astype(compute_dtype), feat_pad, feat_pad),
        "b2": pad2(params["b2"].astype(jnp.float32), 1, feat_pad),
        "w3": pad2(params["w3"].astype(compute_dtype), feat_pad, n_pad),
        "b3": pad2(params["b3"].astype(jnp.float32), 1, n_pad),
        "feat_dim": feat_dim,
        "feat_pad": feat_pad,
        "act_dim": act_dim,
        "n_pad": n_pad,
    }


def _vmem_estimate(tb, feat_dim, feat_pad, n_pad, weight_bytes, weight_buffers):
    return (
        weight_buffers * weight_bytes      # resident bf16 weights + f32 biases
        + 2 * tb * feat_dim * 4            # double-buffered f32 x tiles
        + 2 * tb * n_pad * 2               # double-buffered bf16 out tiles
        + tb * feat_dim * 2                # in-kernel bf16 copy of x
        + 2 * tb * feat_pad * 4            # two f32 intermediates (h1, h2)
        + 2 * tb * feat_pad * 2            # their bf16 casts
        + tb * n_pad * 4                   # f32 head accumulator
    )


def mazenet_forward(state, packed, *, batch_tile=512):
    """state: (B, C, H, W) f32. packed: output of prepack_params()."""
    B = state.shape[0]
    x = state.reshape(B, -1)               # nn.Flatten (NCHW row-major); stays f32.
    feat_dim, feat_pad = packed["feat_dim"], packed["feat_pad"]
    act_dim, n_pad = packed["act_dim"], packed["n_pad"]
    assert x.shape[1] == feat_dim

    w1, b1 = packed["w1"], packed["b1"]
    w2, b2 = packed["w2"], packed["b2"]
    w3, b3 = packed["w3"], packed["b3"]
    weight_bytes = sum(a.size * a.dtype.itemsize for a in (w1, b1, w2, b2, w3, b3))

    # Generation-aware VMEM capacity (v7x per-TC VMEM is half of v5e/v6e).
    try:
        vmem_cap = int(pltpu.get_tpu_info().vmem_capacity_bytes)
    except Exception:
        vmem_cap = 64 * 1024 * 1024        # conservative: v7x per-TensorCore VMEM

    # Batch tiling. Small batches run as a single full-array block (no pad
    # copy needed); large batches stream through a cdiv grid and Pallas masks
    # the tail tile. The grid axis is "parallel" -> sharded across TensorCores.
    if B <= batch_tile:
        tb = B
    else:
        tb = _round_up(batch_tile, 16)
        while tb > 16 and _vmem_estimate(tb, feat_dim, feat_pad, n_pad,
                                         weight_bytes, 1) > 0.8 * vmem_cap:
            tb //= 2
    grid = (pl.cdiv(B, tb),)

    flops = 2 * B * (feat_dim * feat_pad + feat_pad * feat_pad + feat_pad * n_pad)
    bytes_accessed = x.size * x.dtype.itemsize + weight_bytes + B * n_pad * 2
    cost = pl.CostEstimate(flops=flops, transcendentals=0,
                           bytes_accessed=bytes_accessed)

    # Raise scoped-VMEM ceiling only when needed, and never above 80% of the
    # physical capacity of this generation (100 MiB would over-ask on v7x).
    vmem_needed = _vmem_estimate(tb, feat_dim, feat_pad, n_pad, weight_bytes, 2)
    vmem_limit = None
    if vmem_needed > 16 * 1024 * 1024:     # smallest default scoped limit (v5e)
        vmem_limit = int(min(vmem_needed * 1.5, 0.8 * vmem_cap))
    # TODO(synk): once single-buffered bf16 weights (2*feat_pad^2 + feat_pad*n_pad
    # elems, ~40 MiB at feat_dim ~3000) no longer fit v7x's 64 MiB VMEM, switch
    # to a K/N-streamed grid with an f32 VMEM accumulator instead of residency.

    def build(weight_pipeline_mode):
        if weight_pipeline_mode is None:
            resident = lambda arr: pl.BlockSpec(arr.shape, lambda i: (0, 0))
        else:
            resident = lambda arr: pl.BlockSpec(arr.shape, lambda i: (0, 0),
                                                pipeline_mode=weight_pipeline_mode)
        return pl.pallas_call(
            mazenet_kernel,
            out_shape=jax.ShapeDtypeStruct((B, n_pad), jnp.bfloat16),
            grid=grid,
            in_specs=[
                pl.BlockSpec((tb, feat_dim), lambda i: (i, 0)),
                resident(w1), resident(b1),
                resident(w2), resident(b2),
                resident(w3), resident(b3),
            ],
            out_specs=pl.BlockSpec((tb, n_pad), lambda i: (i, 0)),
            compiler_params=pltpu.CompilerParams(
                dimension_semantics=("parallel",),
                vmem_limit_bytes=vmem_limit,
            ),
            cost_estimate=cost,
        )

    try:
        # Weights/biases have a constant block index -> fetched once; a single
        # buffer halves their VMEM footprint (raises the v7x residency ceiling).
        out = build(pl.Buffered(1))(x, w1, b1, w2, b2, w3, b3)
    except Exception:
        # pipeline_mode / Buffered(1) unsupported on this jax: fall back to the
        # default double-buffered (still constant-index, fetched once) specs.
        out = build(None)(x, w1, b1, w2, b2, w3, b3)

    return out[:, :act_dim].astype(jnp.float32)


def init_params(key, feat_dim, act_dim, num_blocks=2):
    """Deterministic init mimicking nn.Linear shapes. Weights stored (in, out), f32."""
    keys = jax.random.split(key, 2 * (num_blocks + 1))
    params = {}
    scale = 1.0 / jnp.sqrt(feat_dim)
    for i in range(num_blocks):
        params[f"w{i+1}"] = jax.random.uniform(
            keys[2 * i], (feat_dim, feat_dim), jnp.float32, -scale, scale)
        params[f"b{i+1}"] = jax.random.uniform(
            keys[2 * i + 1], (1, feat_dim), jnp.float32, -scale, scale)
    params[f"w{num_blocks+1}"] = jax.random.uniform(
        keys[-2], (feat_dim, act_dim), jnp.float32, -scale, scale)
    params[f"b{num_blocks+1}"] = jax.random.uniform(
        keys[-1], (1, act_dim), jnp.float32, -scale, scale)
    return params


def mazenet_reference(state, params):
    x = state.reshape(state.shape[0], -1)
    h = jnp.maximum(x @ params["w1"] + params["b1"], 0.0)
    h = jnp.maximum(h @ params["w2"] + params["b2"], 0.0)
    return h @ params["w3"] + params["b3"]


if __name__ == "__main__":
    # Small shapes: B=2, C=4, H=W=4  =>  feat_dim = 4*4*4 = 64, act_dim = 4
    key = jax.random.PRNGKey(0)
    k_state, k_params = jax.random.split(key)
    state = jax.random.normal(k_state, (2, 4, 4, 4), dtype=jnp.float32)

    feat_dim = 4 * 4 * 4
    act_dim = 4
    params = init_params(k_params, feat_dim, act_dim, num_blocks=2)
    packed = prepack_params(params)   # one-time cast+pad, reused across calls

    out = jax.block_until_ready(mazenet_forward(state, packed))
    ref = mazenet_reference(state, params)

    assert out.shape == (2, act_dim)
    # bf16 compute + bf16 output slab vs f32 reference -> relaxed tolerance.
    assert jnp.allclose(out, ref, atol=7.5e-2, rtol=7.5e-2), (
        f"max abs err {float(jnp.max(jnp.abs(out - ref)))}")
    print("KERNEL_OK")
</pallas_src>

<mosaic_0001>
module attributes {stable_mosaic.version = 11 : i64} {
  func.func @mazenet_kernel(%arg0: i32, %arg1: memref<2x64xf32, #tpu.memory_space<vmem>>, %arg2: memref<64x128xbf16, #tpu.memory_space<vmem>>, %arg3: memref<1x128xf32, #tpu.memory_space<vmem>>, %arg4: memref<128x128xbf16, #tpu.memory_space<vmem>>, %arg5: memref<1x128xf32, #tpu.memory_space<vmem>>, %arg6: memref<128x128xbf16, #tpu.memory_space<vmem>>, %arg7: memref<1x128xf32, #tpu.memory_space<vmem>>, %arg8: memref<2x128xbf16, #tpu.memory_space<vmem>>) attributes {dimension_semantics = [#tpu.dimension_semantics<parallel>], iteration_bounds = array<i64: 1>, scalar_prefetch = 0 : i64, scratch_operands = 0 : i64, tpu.core_type = #tpu.core_type<tc>, window_params = [{transform_indices = @transform_0, window_bounds = array<i64: 2, 64>}, {pipeline_mode = #tpu.pipeline_mode<synchronous>, transform_indices = @transform_1, window_bounds = array<i64: 64, 128>}, {pipeline_mode = #tpu.pipeline_mode<synchronous>, transform_indices = @transform_2, window_bounds = array<i64: 1, 128>}, {pipeline_mode = #tpu.pipeline_mode<synchronous>, transform_indices = @transform_3, window_bounds = array<i64: 128, 128>}, {pipeline_mode = #tpu.pipeline_mode<synchronous>, transform_indices = @transform_4, window_bounds = array<i64: 1, 128>}, {pipeline_mode = #tpu.pipeline_mode<synchronous>, transform_indices = @transform_5, window_bounds = array<i64: 128, 128>}, {pipeline_mode = #tpu.pipeline_mode<synchronous>, transform_indices = @transform_6, window_bounds = array<i64: 1, 128>}, {transform_indices = @transform_7, window_bounds = array<i64: 2, 128>}]} {
    %c0 = arith.constant 0 : index
    %c0_0 = arith.constant 0 : index
    %0 = vector.load %arg1[%c0, %c0_0] : memref<2x64xf32, #tpu.memory_space<vmem>>, vector<2x64xf32>
    %1 = arith.truncf %0 : vector<2x64xf32> to vector<2x64xbf16>
    %c0_1 = arith.constant 0 : index
    %c0_2 = arith.constant 0 : index
    %2 = vector.load %arg2[%c0_1, %c0_2] : memref<64x128xbf16, #tpu.memory_space<vmem>>, vector<64x128xbf16>
    %cst = arith.constant dense<0.000000e+00> : vector<2x128xf32>
    %3 = tpu.matmul %1, %2, %cst {dimension_numbers = #tpu.dot_dimension_numbers<[1], [0], [0], [1], [0, 0, 1, 1], [], []>} : vector<2x64xbf16>, vector<64x128xbf16>, vector<2x128xf32> -> vector<2x128xf32>
    %c0_3 = arith.constant 0 : index
    %c0_4 = arith.constant 0 : index
    %4 = vector.load %arg3[%c0_3, %c0_4] : memref<1x128xf32, #tpu.memory_space<vmem>>, vector<1x128xf32>
    %5 = vector.broadcast %4 : vector<1x128xf32> to vector<2x128xf32>
    %6 = arith.addf %3, %5 : vector<2x128xf32>
    %cst_5 = arith.constant 0.000000e+00 : f32
    %7 = vector.broadcast %cst_5 : f32 to vector<2x128xf32>
    %8 = arith.maximumf %6, %7 : vector<2x128xf32>
    %9 = arith.truncf %8 : vector<2x128xf32> to vector<2x128xbf16>
    %c0_6 = arith.constant 0 : index
    %c0_7 = arith.constant 0 : index
    %10 = vector.load %arg4[%c0_6, %c0_7] : memref<128x128xbf16, #tpu.memory_space<vmem>>, vector<128x128xbf16>
    %cst_8 = arith.constant dense<0.000000e+00> : vector<2x128xf32>
    %11 = tpu.matmul %9, %10, %cst_8 {dimension_numbers = #tpu.dot_dimension_numbers<[1], [0], [0], [1], [0, 0, 1, 1], [], []>} : vector<2x128xbf16>, vector<128x128xbf16>, vector<2x128xf32> -> vector<2x128xf32>
    %c0_9 = arith.constant 0 : index
    %c0_10 = arith.constant 0 : index
    %12 = vector.load %arg5[%c0_9, %c0_10] : memref<1x128xf32, #tpu.memory_space<vmem>>, vector<1x128xf32>
    %13 = vector.broadcast %12 : vector<1x128xf32> to vector<2x128xf32>
    %14 = arith.addf %11, %13 : vector<2x128xf32>
    %cst_11 = arith.constant 0.000000e+00 : f32
    %15 = vector.broadcast %cst_11 : f32 to vector<2x128xf32>
    %16 = arith.maximumf %14, %15 : vector<2x128xf32>
    %17 = arith.truncf %16 : vector<2x128xf32> to vector<2x128xbf16>
    %c0_12 = arith.constant 0 : index
    %c0_13 = arith.constant 0 : index
    %18 = vector.load %arg6[%c0_12, %c0_13] : memref<128x128xbf16, #tpu.memory_space<vmem>>, vector<128x128xbf16>
    %cst_14 = arith.constant dense<0.000000e+00> : vector<2x128xf32>
    %19 = tpu.matmul %17, %18, %cst_14 {dimension_numbers = #tpu.dot_dimension_numbers<[1], [0], [0], [1], [0, 0, 1, 1], [], []>} : vector<2x128xbf16>, vector<128x128xbf16>, vector<2x128xf32> -> vector<2x128xf32>
    %c0_15 = arith.constant 0 : index
    %c0_16 = arith.constant 0 : index
    %20 = vector.load %arg7[%c0_15, %c0_16] : memref<1x128xf32, #tpu.memory_space<vmem>>, vector<1x128xf32>
    %21 = vector.broadcast %20 : vector<1x128xf32> to vector<2x128xf32>
    %22 = arith.addf %19, %21 : vector<2x128xf32>
    %23 = arith.truncf %22 : vector<2x128xf32> to vector<2x128xbf16>
    %c0_17 = arith.constant 0 : index
    %c0_18 = arith.constant 0 : index
    %24 = vector.load %arg8[%c0_17, %c0_18] : memref<2x128xbf16, #tpu.memory_space<vmem>>, vector<2x128xbf16>
    tpu.vector_store %arg8[%c0_17, %c0_18], %23 {strides = array<i32>} : memref<2x128xbf16, #tpu.memory_space<vmem>>, vector<2x128xbf16>,
    return
  }
  func.func @transform_0(%arg0: i32) -> (i32, i32) {
    %c0_i32 = arith.constant 0 : i32
    %c0_i32_0 = arith.constant 0 : i32
    return %arg0, %c0_i32 : i32, i32
  }
  func.func @transform_1(%arg0: i32) -> (i32, i32) {
    %c0_i32 = arith.constant 0 : i32
    %c0_i32_0 = arith.constant 0 : i32
    %c0_i32_1 = arith.constant 0 : i32
    return %c0_i32, %c0_i32_0 : i32, i32
  }
  func.func @transform_2(%arg0: i32) -> (i32, i32) {
    %c0_i32 = arith.constant 0 : i32
    %c0_i32_0 = arith.constant 0 : i32
    %c0_i32_1 = arith.constant 0 : i32
    return %c0_i32, %c0_i32_0 : i32, i32
  }
  func.func @transform_3(%arg0: i32) -> (i32, i32) {
    %c0_i32 = arith.constant 0 : i32
    %c0_i32_0 = arith.constant 0 : i32
    %c0_i32_1 = arith.constant 0 : i32
    return %c0_i32, %c0_i32_0 : i32, i32
  }
  func.func @transform_4(%arg0: i32) -> (i32, i32) {
    %c0_i32 = arith.constant 0 : i32
    %c0_i32_0 = arith.constant 0 : i32
    %c0_i32_1 = arith.constant 0 : i32
    return %c0_i32, %c0_i32_0 : i32, i32
  }
  func.func @transform_5(%arg0: i32) -> (i32, i32) {
    %c0_i32 = arith.constant 0 : i32
    %c0_i32_0 = arith.constant 0 : i32
    %c0_i32_1 = arith.constant 0 : i32
    return %c0_i32, %c0_i32_0 : i32, i32
  }
  func.func @transform_6(%arg0: i32) -> (i32, i32) {
    %c0_i32 = arith.constant 0 : i32
    %c0_i32_0 = arith.constant 0 : i32
    %c0_i32_1 = arith.constant 0 : i32
    return %c0_i32, %c0_i32_0 : i32, i32
  }
  func.func @transform_7(%arg0: i32) -> (i32, i32) {
    %c0_i32 = arith.constant 0 : i32
    %c0_i32_0 = arith.constant 0 : i32
    return %arg0, %c0_i32 : i32, i32
  }
}

module attributes {stable_mosaic.version = 11 : i64} {
  func.func @mazenet_kernel(%arg0: i32, %arg1: memref<2x64xf32, #tpu.memory_space<vmem>>, %arg2: memref<64x128xbf16, #tpu.memory_space<vmem>>, %arg3: memref<1x128xf32, #tpu.memory_space<vmem>>, %arg4: memref<128x128xbf16, #tpu.memory_space<vmem>>, %arg5: memref<1x128xf32, #tpu.memory_space<vmem>>, %arg6: memref<128x128xbf16, #tpu.memory_space<vmem>>, %arg7: memref<1x128xf32, #tpu.memory_space<vmem>>, %arg8: memref<2x128xbf16, #tpu.memory_space<vmem>>) attributes {dimension_semantics = [#tpu.dimension_semantics<parallel>], iteration_bounds = array<i64: 1>, scalar_prefetch = 0 : i64, scratch_operands = 0 : i64, tpu.core_type = #tpu.core_type<tc>, window_params = [{transform_indices = @transform_0, window_bounds = array<i64: 2, 64>}, {pipeline_mode = #tpu.pipeline_mode<synchronous>, transform_indices = @transform_1, window_bounds = array<i64: 64, 128>}, {pipeline_mode = #tpu.pipeline_mode<synchronous>, transform_indices = @transform_2, window_bounds = array<i64: 1, 128>}, {pipeline_mode = #tpu.pipeline_mode<synchronous>, transform_indices = @transform_3, window_bounds = array<i64: 128, 128>}, {pipeline_mode = #tpu.pipeline_mode<synchronous>, transform_indices = @transform_4, window_bounds = array<i64: 1, 128>}, {pipeline_mode = #tpu.pipeline_mode<synchronous>, transform_indices = @transform_5, window_bounds = array<i64: 128, 128>}, {pipeline_mode = #tpu.pipeline_mode<synchronous>, transform_indices = @transform_6, window_bounds = array<i64: 1, 128>}, {transform_indices = @transform_7, window_bounds = array<i64: 2, 128>}]} {
    %c0 = arith.constant 0 : index
    %c0_0 = arith.constant 0 : index
    %0 = vector.load %arg1[%c0, %c0_0] : memref<2x64xf32, #tpu.memory_space<vmem>>, vector<2x64xf32>
    %1 = arith.truncf %0 : vector<2x64xf32> to vector<2x64xbf16>
    %c0_1 = arith.constant 0 : index
    %c0_2 = arith.constant 0 : index
    %2 = vector.load %arg2[%c0_1, %c0_2] : memref<64x128xbf16, #tpu.memory_space<vmem>>, vector<64x128xbf16>
    %cst = arith.constant dense<0.000000e+00> : vector<2x128xf32>
    %3 = tpu.matmul %1, %2, %cst {dimension_numbers = #tpu.dot_dimension_numbers<[1], [0], [0], [1], [0, 0, 1, 1], [], []>} : vector<2x64xbf16>, vector<64x128xbf16>, vector<2x128xf32> -> vector<2x128xf32>
    %c0_3 = arith.constant 0 : index
    %c0_4 = arith.constant 0 : index
    %4 = vector.load %arg3[%c0_3, %c0_4] : memref<1x128xf32, #tpu.memory_space<vmem>>, vector<1x128xf32>
    %5 = vector.broadcast %4 : vector<1x128xf32> to vector<2x128xf32>
    %6 = arith.addf %3, %5 : vector<2x128xf32>
    %cst_5 = arith.constant 0.000000e+00 : f32
    %7 = vector.broadcast %cst_5 : f32 to vector<2x128xf32>
    %8 = arith.maximumf %6, %7 : vector<2x128xf32>
    %9 = arith.truncf %8 : vector<2x128xf32> to vector<2x128xbf16>
    %c0_6 = arith.constant 0 : index
    %c0_7 = arith.constant 0 : index
    %10 = vector.load %arg4[%c0_6, %c0_7] : memref<128x128xbf16, #tpu.memory_space<vmem>>, vector<128x128xbf16>
    %cst_8 = arith.constant dense<0.000000e+00> : vector<2x128xf32>
    %11 = tpu.matmul %9, %10, %cst_8 {dimension_numbers = #tpu.dot_dimension_numbers<[1], [0], [0], [1], [0, 0, 1, 1], [], []>} : vector<2x128xbf16>, vector<128x128xbf16>, vector<2x128xf32> -> vector<2x128xf32>
    %c0_9 = arith.constant 0 : index
    %c0_10 = arith.constant 0 : index
    %12 = vector.load %arg5[%c0_9, %c0_10] : memref<1x128xf32, #tpu.memory_space<vmem>>, vector<1x128xf32>
    %13 = vector.broadcast %12 : vector<1x128xf32> to vector<2x128xf32>
    %14 = arith.addf %11, %13 : vector<2x128xf32>
    %cst_11 = arith.constant 0.000000e+00 : f32
    %15 = vector.broadcast %cst_11 : f32 to vector<2x128xf32>
    %16 = arith.maximumf %14, %15 : vector<2x128xf32>
    %17 = arith.truncf %16 : vector<2x128xf32> to vector<2x128xbf16>
    %c0_12 = arith.constant 0 : index
    %c0_13 = arith.constant 0 : index
    %18 = vector.load %arg6[%c0_12, %c0_13] : memref<128x128xbf16, #tpu.memory_space<vmem>>, vector<128x128xbf16>
    %cst_14 = arith.constant dense<0.000000e+00> : vector<2x128xf32>
    %19 = tpu.matmul %17, %18, %cst_14 {dimension_numbers = #tpu.dot_dimension_numbers<[1], [0], [0], [1], [0, 0, 1, 1], [], []>} : vector<2x128xbf16>, vector<128x128xbf16>, vector<2x128xf32> -> vector<2x128xf32>
    %c0_15 = arith.constant 0 : index
    %c0_16 = arith.constant 0 : index
    %20 = vector.load %arg7[%c0_15, %c0_16] : memref<1x128xf32, #tpu.memory_space<vmem>>, vector<1x128xf32>
    %21 = vector.broadcast %20 : vector<1x128xf32> to vector<2x128xf32>
    %22 = arith.addf %19, %21 : vector<2x128xf32>
    %23 = arith.truncf %22 : vector<2x128xf32> to vector<2x128xbf16>
    %c0_17 = arith.constant 0 : index
    %c0_18 = arith.constant 0 : index
    %24 = vector.load %arg8[%c0_17, %c0_18] : memref<2x128xbf16, #tpu.memory_space<vmem>>, vector<2x128xbf16>
    tpu.vector_store %arg8[%c0_17, %c0_18], %23 {strides = array<i32>} : memref<2x128xbf16, #tpu.memory_space<vmem>>, vector<2x128xbf16>,
    return
  }
  func.func @transform_0(%arg0: i32) -> (i32, i32) {
    %c0_i32 = arith.constant 0 : i32
    %c0_i32_0 = arith.constant 0 : i32
    return %arg0, %c0_i32 : i32, i32
  }
  func.func @transform_1(%arg0: i32) -> (i32, i32) {
    %c0_i32 = arith.constant 0 : i32
    %c0_i32_0 = arith.constant 0 : i32
    %c0_i32_1 = arith.constant 0 : i32
    return %c0_i32, %c0_i32_0 : i32, i32
  }
  func.func @transform_2(%arg0: i32) -> (i32, i32) {
    %c0_i32 = arith.constant 0 : i32
    %c0_i32_0 = arith.constant 0 : i32
    %c0_i32_1 = arith.constant 0 : i32
    return %c0_i32, %c0_i32_0 : i32, i32
  }
  func.func @transform_3(%arg0: i32) -> (i32, i32) {
    %c0_i32 = arith.constant 0 : i32
    %c0_i32_0 = arith.constant 0 : i32
    %c0_i32_1 = arith.constant 0 : i32
    return %c0_i32, %c0_i32_0 : i32, i32
  }
  func.func @transform_4(%arg0: i32) -> (i32, i32) {
    %c0_i32 = arith.constant 0 : i32
    %c0_i32_0 = arith.constant 0 : i32
    %c0_i32_1 = arith.constant 0 : i32
    return %c0_i32, %c0_i32_0 : i32, i32
  }
  func.func @transform_5(%arg0: i32) -> (i32, i32) {
    %c0_i32 = arith.constant 0 : i32
    %c0_i32_0 = arith.constant 0 : i32
    %c0_i32_1 = arith.constant 0 : i32
    return %c0_i32, %c0_i32_0 : i32, i32
  }
  func.func @transform_6(%arg0: i32) -> (i32, i32) {
    %c0_i32 = arith.constant 0 : i32
    %c0_i32_0 = arith.constant 0 : i32
    %c0_i32_1 = arith.constant 0 : i32
    return %c0_i32, %c0_i32_0 : i32, i32
  }
  func.func @transform_7(%arg0: i32) -> (i32, i32) {
    %c0_i32 = arith.constant 0 : i32
    %c0_i32_0 = arith.constant 0 : i32
    return %arg0, %c0_i32 : i32, i32
  }
}

</mosaic_0001>

<llo_original>
// kernel: tpu_custom_call.1
$region0: #{tpu_custom_call.1}
  #allocation0 [shape = 'u32[]', space=smem, size = 0x4, offset = 0x4, fixed_abs, tag = 'smem constant byte address 0x4 - core index']
  #allocation1 [shape = 'u32[144,128]{1,0:T(1,128)}', space=vmem, size = 0x12000, scoped, tag = 'internal scratch']
  %s0 = inlined_call_operand.hbm [shape: f32[2,64], index: 0, kind: input, shape index: {}]
  %s1 = inlined_call_operand.hbm [shape: bf16[64,128], index: 1, kind: input, shape index: {}]
  %s2 = inlined_call_operand.vmem [shape: f32[1,128], index: 2, kind: input, shape index: {}]
  %s3 = inlined_call_operand.hbm [shape: bf16[128,128], index: 3, kind: input, shape index: {}]
  %s4 = inlined_call_operand.vmem [shape: f32[1,128], index: 4, kind: input, shape index: {}]
  %s5 = inlined_call_operand.hbm [shape: bf16[128,128], index: 5, kind: input, shape index: {}]
  %s6 = inlined_call_operand.vmem [shape: f32[1,128], index: 6, kind: input, shape index: {}]
  %s7 = inlined_call_operand.hbm [shape: bf16[2,128], index: 7, kind: output, shape index: {}]
  %s8 = sld [smem:[#allocation0]]
  $region54: #{tpu_custom_call.1} parent=0
    _
  %s10 = ssub.s32 1, %s8
  %s11 = scalar_select 0, %s10, %s8
  $region1: #{tpu_custom_call.1} parent=0
    #allocation2 [shape = 'u8[1024]{0}', space=vmem, size = 0x400, scoped, tag = 'input window, operand 0, single buffered']
    #allocation3 [shape = 's32[1]{0}', space=sflag, size = 0x4, scoped, tag = 'scoped memory for tpu_custom_call.1']
    #allocation4 [shape = 's32[1]{0}', space=sflag, size = 0x4, scoped, tag = 'scoped memory for tpu_custom_call.1']
    #allocation5 [shape = 'u8[16384]{0}', space=vmem, size = 0x4000, scoped, tag = 'input window, operand 1, single buffered']
    #allocation6 [shape = 's32[1]{0}', space=sflag, size = 0x4, scoped, tag = 'scoped memory for tpu_custom_call.1']
    #allocation7 [shape = 'u8[32768]{0}', space=vmem, size = 0x8000, scoped, tag = 'input window, operand 3, single buffered']
    #allocation8 [shape = 'u8[32768]{0}', space=vmem, size = 0x8000, scoped, tag = 'input window, operand 5, single buffered']
    #allocation9 [shape = 's32[1]{0}', space=sflag, size = 0x4, scoped, tag = 'scoped memory for tpu_custom_call.1']
    #allocation10 [shape = 'u8[512]{0}', space=vmem, size = 0x400, scoped, tag = 'output window, operand 0, single buffered']
    %12 = vsyncpa [#allocation3], 0
    %13 = vsyncpa [#allocation6], 0
    %14 = vsyncpa [#allocation9], 0
    %15 = vsyncpa [#allocation4], 0
    // Predicated region
    $region2: #{tpu_custom_call.1} parent=1 // pred_check
      _
    $region3: #{tpu_custom_call.1} parent=1 // pred_check_branch
      %17 = sbr.rel (0) target = $region5
    $region4: #{tpu_custom_call.1} parent=1 // pred_region
      %s19 = ssub.s32 32, 32
      %20 = vsyncadd [#allocation3], %s19
      %s22 = sshll.u32 [#allocation2], 4
      %s23 = int_to_ptr.vmem [resolvable:$true] %s22
      %25 = dma.hbm_to_vmem [thread:$0]  %s0, 32, %s23, [#allocation3]
    $region5: #{tpu_custom_call.1} parent=1 // pred_fallthru
      _
    // Predicated region
    $region6: #{tpu_custom_call.1} parent=1 // pred_check
      _
    $region7: #{tpu_custom_call.1} parent=1 // pred_check_branch
      %27 = sbr.rel (0) target = $region9
    $region8: #{tpu_custom_call.1} parent=1 // pred_region
      %s29 = ssub.s32 512, 512
      %30 = vsyncadd [#allocation6], %s29
      %s31 = sshll.u32 [#allocation5], 4
      %s32 = int_to_ptr.vmem [resolvable:$true] %s31
      %37 = dma.hbm_to_vmem [thread:$0]  %s1, 512, %s32, [#allocation6], 64, 64, 4
    $region9: #{tpu_custom_call.1} parent=1 // pred_fallthru
      _
    // Predicated region
    $region10: #{tpu_custom_call.1} parent=1 // pred_check
      _
    $region11: #{tpu_custom_call.1} parent=1 // pred_check_branch
      %39 = sbr.rel (0) target = $region13
    $region12: #{tpu_custom_call.1} parent=1 // pred_region
      _
    $region13: #{tpu_custom_call.1} parent=1 // pred_fallthru
      _
    // Predicated region
    $region14: #{tpu_custom_call.1} parent=1 // pred_check
      _
    $region15: #{tpu_custom_call.1} parent=1 // pred_check_branch
      %41 = sbr.rel (0) target = $region17
    $region16: #{tpu_custom_call.1} parent=1 // pred_region
      %s43 = ssub.s32 1024, 1024
      %44 = vsyncadd [#allocation6], %s43
      %s45 = sshll.u32 [#allocation7], 4
      %s46 = int_to_ptr.vmem [resolvable:$true] %s45
      %51 = dma.hbm_to_vmem [thread:$0]  %s3, 1024, %s46, [#allocation6], 64, 64, 4
    $region17: #{tpu_custom_call.1} parent=1 // pred_fallthru
      _
    // Predicated region
    $region18: #{tpu_custom_call.1} parent=1 // pred_check
      _
    $region19: #{tpu_custom_call.1} parent=1 // pred_check_branch
      %53 = sbr.rel (0) target = $region21
    $region20: #{tpu_custom_call.1} parent=1 // pred_region
      _
    $region21: #{tpu_custom_call.1} parent=1 // pred_fallthru
      _
    // Predicated region
    $region22: #{tpu_custom_call.1} parent=1 // pred_check
      _
    $region23: #{tpu_custom_call.1} parent=1 // pred_check_branch
      %55 = sbr.rel (0) target = $region25
    $region24: #{tpu_custom_call.1} parent=1 // pred_region
      %s57 = ssub.s32 1024, 1024
      %58 = vsyncadd [#allocation9], %s57
      %s59 = sshll.u32 [#allocation8], 4
      %s60 = int_to_ptr.vmem [resolvable:$true] %s59
      %65 = dma.hbm_to_vmem [thread:$0]  %s5, 1024, %s60, [#allocation9], 64, 64, 4
    $region25: #{tpu_custom_call.1} parent=1 // pred_fallthru
      _
    // Predicated region
    $region26: #{tpu_custom_call.1} parent=1 // pred_check
      _
    $region27: #{tpu_custom_call.1} parent=1 // pred_check_branch
      %67 = sbr.rel (0) target = $region29
    $region28: #{tpu_custom_call.1} parent=1 // pred_region
      _
    $region29: #{tpu_custom_call.1} parent=1 // pred_fallthru
      _
    // Predicated region
    $region30: #{tpu_custom_call.1} parent=1 // pred_check
      _
    $region31: #{tpu_custom_call.1} parent=1 // pred_check_branch
      %69 = sbr.rel (0) target = $region33
    $region32: #{tpu_custom_call.1} parent=1 // pred_region
      %70 = dma.done [#allocation3], 32
    $region33: #{tpu_custom_call.1} parent=1 // pred_fallthru
      _
    // Predicated region
    $region34: #{tpu_custom_call.1} parent=1 // pred_check
      _
    $region35: #{tpu_custom_call.1} parent=1 // pred_check_branch
      %72 = sbr.rel (0) target = $region37
    $region36: #{tpu_custom_call.1} parent=1 // pred_region
      %73 = dma.done [#allocation6], 512
    $region37: #{tpu_custom_call.1} parent=1 // pred_fallthru
      _
    // Predicated region
    $region38: #{tpu_custom_call.1} parent=1 // pred_check
      _
    $region39: #{tpu_custom_call.1} parent=1 // pred_check_branch
      %75 = sbr.rel (0) target = $region41
    $region40: #{tpu_custom_call.1} parent=1 // pred_region
      %76 = dma.done [#allocation6], 1024
    $region41: #{tpu_custom_call.1} parent=1 // pred_fallthru
      _
    // Predicated region
    $region42: #{tpu_custom_call.1} parent=1 // pred_check
      _
    $region43: #{tpu_custom_call.1} parent=1 // pred_check_branch
      %78 = sbr.rel (0) target = $region45
    $region44: #{tpu_custom_call.1} parent=1 // pred_region
      %79 = dma.done [#allocation9], 1024
    $region45: #{tpu_custom_call.1} parent=1 // pred_fallthru
      _
    %v81 = vld [vmem:[#allocation2] sm:$0x3]
    %v82 = vpack.c.bf16 %v81, %v81
    %v83 = vld [vmem:[#allocation5] sm:$0xf]
    %v84 = vld [vmem:[#allocation5 + $0x4] sm:$0xf]
    %v85 = vld [vmem:[#allocation5 + $0x8] sm:$0xf]
    %v86 = vld [vmem:[#allocation5 + $0xc] sm:$0xf]
    %v87 = vld [vmem:[#allocation5 + $0x10] sm:$0xf]
    %v88 = vld [vmem:[#allocation5 + $0x14] sm:$0xf]
    %v89 = vld [vmem:[#allocation5 + $0x18] sm:$0xf]
    %v90 = vld [vmem:[#allocation5 + $0x1c] sm:$0xf]
    %v91 = vld [vmem:[%s2] sm:$0x1]
    %v93 = vlaneseq
    %v94 = vshrl.u32 %v93, 7
    %v95 = vsub.s32 0, %v94
    %v96 = vrot.slane %v91, %v95
    %v106 = vunpack.c.l.b16 %v83
    %v107 = vunpack.c.l.b16 %v84
    %v108 = vunpack.c.l.b16 %v85
    %v109 = vunpack.c.l.b16 %v86
    %v110 = vunpack.c.l.b16 %v87
    %v111 = vunpack.c.l.b16 %v88
    %v112 = vunpack.c.l.b16 %v89
    %v113 = vunpack.c.l.b16 %v90
    %v114 = vpack.c.b16 %v107, %v106
    %v115 = vpack.c.b16 %v109, %v108
    %v116 = vpack.c.b16 %v111, %v110
    %v117 = vpack.c.b16 %v113, %v112
    %vm122 = vcmask 523264
    %v124 = vsel %vm122, %v82, 0
    %126 = vmatprep.subr.bf16.mxu0 0
    %127 = vmatpush1.bf16.msra.mxu0 %v114
    %128 = vmatprep.subr.bf16.mxu0 0
    %129 = vmatpush1.bf16.msra.mxu0 %v115
    %130 = vmatprep.subr.bf16.mxu0 0
    %131 = vmatpush1.bf16.msra.mxu0 %v116
    %132 = vmatprep.subr.bf16.mxu0 0
    %133 = vmatpush1.bf16.msra.mxu0 %v117
    %134 = vmatprep.subr.bf16.mxu0 0
    %135 = vmatpush1.bf16.msra.mxu0 0
    %136 = vmatprep.subr.bf16.mxu0 0
    %137 = vmatpush1.bf16.msra.mxu0 0
    %138 = vmatprep.subr.bf16.mxu0 0
    %139 = vmatpush1.bf16.msra.mxu0 0
    %140 = vmatprep.subr.bf16.mxu0 0
    %141 = vmatpush1.bf16.msra.mxu0 0
    %142 = vmatprep.subr.bf16.mxu0 0
    %143 = vmatpush1.bf16.msra.mxu0 0
    %144 = vmatprep.subr.bf16.mxu0 0
    %145 = vmatpush1.bf16.msra.mxu0 0
    %146 = vmatprep.subr.bf16.mxu0 0
    %147 = vmatpush1.bf16.msra.mxu0 0
    %148 = vmatprep.subr.bf16.mxu0 0
    %149 = vmatpush1.bf16.msra.mxu0 0
    %150 = vmatprep.subr.bf16.mxu0 0
    %151 = vmatpush1.bf16.msra.mxu0 0
    %152 = vmatprep.subr.bf16.mxu0 0
    %153 = vmatpush1.bf16.msra.mxu0 0
    %154 = vmatprep.subr.bf16.mxu0 0
    %155 = vmatpush1.bf16.msra.mxu0 0
    %156 = vmatprep.subr.bf16.mxu0 0
    %157 = vmatpush1.bf16.msra.mxu0 0
    %158 = vmatprep.mubr.bf16.mxu0 0
    %159 = vmatmul.mubr.bf16.gmra.mrb[0].mxu0 %v124
    %v160 = vpop.f32.mrb[0].mxu0
    %v161 = vadd.f32 %v96, %v160
    %v162 = vpop.f32.mrb[0].mxu0
    %v163 = vpop.f32.mrb[0].mxu0
    %v164 = vpop.f32.mrb[0].mxu0
    %165 = vdwg.mxu0
    %v166 = vmax.f32 %v161, 0.0
    %v167 = vpack.c.bf16 %v166, %v166
    %v168 = vld [vmem:[#allocation7] sm:$0xf]
    %v169 = vld [vmem:[#allocation7 + $0x4] sm:$0xf]
    %v170 = vld [vmem:[#allocation7 + $0x8] sm:$0xf]
    %v171 = vld [vmem:[#allocation7 + $0xc] sm:$0xf]
    %v172 = vld [vmem:[#allocation7 + $0x10] sm:$0xf]
    %v173 = vld [vmem:[#allocation7 + $0x14] sm:$0xf]
    %v174 = vld [vmem:[#allocation7 + $0x18] sm:$0xf]
    %v175 = vld [vmem:[#allocation7 + $0x1c] sm:$0xf]
    %v176 = vld [vmem:[#allocation7 + $0x20] sm:$0xf]
    %v177 = vld [vmem:[#allocation7 + $0x24] sm:$0xf]
    %v178 = vld [vmem:[#allocation7 + $0x28] sm:$0xf]
    %v179 = vld [vmem:[#allocation7 + $0x2c] sm:$0xf]
    %v180 = vld [vmem:[#allocation7 + $0x30] sm:$0xf]
    %v181 = vld [vmem:[#allocation7 + $0x34] sm:$0xf]
    %v182 = vld [vmem:[#allocation7 + $0x38] sm:$0xf]
    %v183 = vld [vmem:[#allocation7 + $0x3c] sm:$0xf]
    %v184 = vld [vmem:[%s4] sm:$0x1]
    %v186 = vlaneseq
    %v187 = vshrl.u32 %v186, 7
    %v188 = vsub.s32 0, %v187
    %v189 = vrot.slane %v184, %v188
    %v207 = vunpack.c.l.b16 %v168
    %v208 = vunpack.c.l.b16 %v169
    %v209 = vunpack.c.l.b16 %v170
    %v210 = vunpack.c.l.b16 %v171
    %v211 = vunpack.c.l.b16 %v172
    %v212 = vunpack.c.l.b16 %v173
    %v213 = vunpack.c.l.b16 %v174
    %v214 = vunpack.c.l.b16 %v175
    %v215 = vunpack.c.l.b16 %v176
    %v216 = vunpack.c.l.b16 %v177
    %v217 = vunpack.c.l.b16 %v178
    %v218 = vunpack.c.l.b16 %v179
    %v219 = vunpack.c.l.b16 %v180
    %v220 = vunpack.c.l.b16 %v181
    %v221 = vunpack.c.l.b16 %v182
    %v222 = vunpack.c.l.b16 %v183
    %v223 = vpack.c.b16 %v208, %v207
    %v224 = vpack.c.b16 %v210, %v209
    %v225 = vpack.c.b16 %v212, %v211
    %v226 = vpack.c.b16 %v214, %v213
    %v227 = vpack.c.b16 %v216, %v215
    %v228 = vpack.c.b16 %v218, %v217
    %v229 = vpack.c.b16 %v220, %v219
    %v230 = vpack.c.b16 %v222, %v221
    %239 = vmatprep.subr.bf16.mxu0 0
    %240 = vmatpush1.bf16.msra.mxu0 %v223
    %241 = vmatprep.subr.bf16.mxu0 0
    %242 = vmatpush1.bf16.msra.mxu0 %v224
    %243 = vmatprep.subr.bf16.mxu0 0
    %244 = vmatpush1.bf16.msra.mxu0 %v225
    %245 = vmatprep.subr.bf16.mxu0 0
    %246 = vmatpush1.bf16.msra.mxu0 %v226
    %247 = vmatprep.subr.bf16.mxu0 0
    %248 = vmatpush1.bf16.msra.mxu0 %v227
    %249 = vmatprep.subr.bf16.mxu0 0
    %250 = vmatpush1.bf16.msra.mxu0 %v228
    %251 = vmatprep.subr.bf16.mxu0 0
    %252 = vmatpush1.bf16.msra.mxu0 %v229
    %253 = vmatprep.subr.bf16.mxu0 0
    %254 = vmatpush1.bf16.msra.mxu0 %v230
    %255 = vmatprep.subr.bf16.mxu0 0
    %256 = vmatpush1.bf16.msra.mxu0 0
    %257 = vmatprep.subr.bf16.mxu0 0
    %258 = vmatpush1.bf16.msra.mxu0 0
    %259 = vmatprep.subr.bf16.mxu0 0
    %260 = vmatpush1.bf16.msra.mxu0 0
    %261 = vmatprep.subr.bf16.mxu0 0
    %262 = vmatpush1.bf16.msra.mxu0 0
    %263 = vmatprep.subr.bf16.mxu0 0
    %264 = vmatpush1.bf16.msra.mxu0 0
    %265 = vmatprep.subr.bf16.mxu0 0
    %266 = vmatpush1.bf16.msra.mxu0 0
    %267 = vmatprep.subr.bf16.mxu0 0
    %268 = vmatpush1.bf16.msra.mxu0 0
    %269 = vmatprep.subr.bf16.mxu0 0
    %270 = vmatpush1.bf16.msra.mxu0 0
    %271 = vmatprep.mubr.bf16.mxu0 0
    %272 = vmatmul.mubr.bf16.gmra.mrb[0].mxu0 %v167
    %v273 = vpop.f32.mrb[0].mxu0
    %v274 = vadd.f32 %v189, %v273
    %v275 = vpop.f32.mrb[0].mxu0
    %v276 = vpop.f32.mrb[0].mxu0
    %v277 = vpop.f32.mrb[0].mxu0
    %278 = vdwg.mxu0
    %v279 = vmax.f32 %v274, 0.0
    %v280 = vpack.c.bf16 %v279, %v279
    %v281 = vld [vmem:[#allocation8] sm:$0xf]
    %v282 = vld [vmem:[#allocation8 + $0x4] sm:$0xf]
    %v283 = vld [vmem:[#allocation8 + $0x8] sm:$0xf]
    %v284 = vld [vmem:[#allocation8 + $0xc] sm:$0xf]
    %v285 = vld [vmem:[#allocation8 + $0x10] sm:$0xf]
    %v286 = vld [vmem:[#allocation8 + $0x14] sm:$0xf]
    %v287 = vld [vmem:[#allocation8 + $0x18] sm:$0xf]
    %v288 = vld [vmem:[#allocation8 + $0x1c] sm:$0xf]
    %v289 = vld [vmem:[#allocation8 + $0x20] sm:$0xf]
    %v290 = vld [vmem:[#allocation8 + $0x24] sm:$0xf]
    %v291 = vld [vmem:[#allocation8 + $0x28] sm:$0xf]
    %v292 = vld [vmem:[#allocation8 + $0x2c] sm:$0xf]
    %v293 = vld [vmem:[#allocation8 + $0x30] sm:$0xf]
    %v294 = vld [vmem:[#allocation8 + $0x34] sm:$0xf]
    %v295 = vld [vmem:[#allocation8 + $0x38] sm:$0xf]
    %v296 = vld [vmem:[#allocation8 + $0x3c] sm:$0xf]
    %v297 = vld [vmem:[%s6] sm:$0x1]
    %v299 = vlaneseq
    %v300 = vshrl.u32 %v299, 7
    %v301 = vsub.s32 0, %v300
    %v302 = vrot.slane %v297, %v301
    %v320 = vunpack.c.l.b16 %v281
    %v321 = vunpack.c.l.b16 %v282
    %v322 = vunpack.c.l.b16 %v283
    %v323 = vunpack.c.l.b16 %v284
    %v324 = vunpack.c.l.b16 %v285
    %v325 = vunpack.c.l.b16 %v286
    %v326 = vunpack.c.l.b16 %v287
    %v327 = vunpack.c.l.b16 %v288
    %v328 = vunpack.c.l.b16 %v289
    %v329 = vunpack.c.l.b16 %v290
    %v330 = vunpack.c.l.b16 %v291
    %v331 = vunpack.c.l.b16 %v292
    %v332 = vunpack.c.l.b16 %v293
    %v333 = vunpack.c.l.b16 %v294
    %v334 = vunpack.c.l.b16 %v295
    %v335 = vunpack.c.l.b16 %v296
    %v336 = vpack.c.b16 %v321, %v320
    %v337 = vpack.c.b16 %v323, %v322
    %v338 = vpack.c.b16 %v325, %v324
    %v339 = vpack.c.b16 %v327, %v326
    %v340 = vpack.c.b16 %v329, %v328
    %v341 = vpack.c.b16 %v331, %v330
    %v342 = vpack.c.b16 %v333, %v332
    %v343 = vpack.c.b16 %v335, %v334
    %352 = vmatprep.subr.bf16.mxu0 0
    %353 = vmatpush1.bf16.msra.mxu0 %v336
    %354 = vmatprep.subr.bf16.mxu0 0
    %355 = vmatpush1.bf16.msra.mxu0 %v337
    %356 = vmatprep.subr.bf16.mxu0 0
    %357 = vmatpush1.bf16.msra.mxu0 %v338
    %358 = vmatprep.subr.bf16.mxu0 0
    %359 = vmatpush1.bf16.msra.mxu0 %v339
    %360 = vmatprep.subr.bf16.mxu0 0
    %361 = vmatpush1.bf16.msra.mxu0 %v340
    %362 = vmatprep.subr.bf16.mxu0 0
    %363 = vmatpush1.bf16.msra.mxu0 %v341
    %364 = vmatprep.subr.bf16.mxu0 0
    %365 = vmatpush1.bf16.msra.mxu0 %v342
    %366 = vmatprep.subr.bf16.mxu0 0
    %367 = vmatpush1.bf16.msra.mxu0 %v343
    %368 = vmatprep.subr.bf16.mxu0 0
    %369 = vmatpush1.bf16.msra.mxu0 0
    %370 = vmatprep.subr.bf16.mxu0 0
    %371 = vmatpush1.bf16.msra.mxu0 0
    %372 = vmatprep.subr.bf16.mxu0 0
    %373 = vmatpush1.bf16.msra.mxu0 0
    %374 = vmatprep.subr.bf16.mxu0 0
    %375 = vmatpush1.bf16.msra.mxu0 0
    %376 = vmatprep.subr.bf16.mxu0 0
    %377 = vmatpush1.bf16.msra.mxu0 0
    %378 = vmatprep.subr.bf16.mxu0 0
    %379 = vmatpush1.bf16.msra.mxu0 0
    %380 = vmatprep.subr.bf16.mxu0 0
    %381 = vmatpush1.bf16.msra.mxu0 0
    %382 = vmatprep.subr.bf16.mxu0 0
    %383 = vmatpush1.bf16.msra.mxu0 0
    %384 = vmatprep.mubr.bf16.mxu0 0
    %385 = vmatmul.mubr.bf16.gmra.mrb[0].mxu0 %v280
    %v386 = vpop.f32.mrb[0].mxu0
    %v387 = vadd.f32 %v302, %v386
    %v388 = vpop.f32.mrb[0].mxu0
    %v389 = vpop.f32.mrb[0].mxu0
    %v390 = vpop.f32.mrb[0].mxu0
    %391 = vdwg.mxu0
    %v392 = vpack.c.bf16 %v387, %v387
    %393 = vst [vmem:[#allocation10] sm:$0x1] %v392
    // Predicated region
    $region46: #{tpu_custom_call.1} parent=1 // pred_check
      _
    $region47: #{tpu_custom_call.1} parent=1 // pred_check_branch
      %395 = sbr.rel (0) target = $region49
    $region48: #{tpu_custom_call.1} parent=1 // pred_region
      %s397 = ssub.s32 16, 16
      %398 = vsyncadd [#allocation4], %s397
      %s400 = sshll.u32 [#allocation10], 4
      %s401 = int_to_ptr.vmem [resolvable:$true] %s400
      %403 = dma.vmem_to_hbm [thread:$0]  %s401, 16, %s7, [#allocation4]
    $region49: #{tpu_custom_call.1} parent=1 // pred_fallthru
      _
    // Predicated region
    $region50: #{tpu_custom_call.1} parent=1 // pred_check
      _
    $region51: #{tpu_custom_call.1} parent=1 // pred_check_branch
      %405 = sbr.rel (0) target = $region53
    $region52: #{tpu_custom_call.1} parent=1 // pred_region
      %406 = dma.done [#allocation4], 16
    $region53: #{tpu_custom_call.1} parent=1 // pred_fallthru
      _
    %407 = vsyncpa [#allocation3], 1
    %408 = vsyncpa [#allocation6], 1
    %409 = vsyncpa [#allocation9], 1
    %410 = vsyncpa [#allocation4], 1

// kernel: tpu_custom_call.1
$region0: #{tpu_custom_call.1}
  #allocation0 [shape = 'u32[]', space=smem, size = 0x4, offset = 0x4, fixed_abs, tag = 'smem constant byte address 0x4 - core index']
  #allocation1 [shape = 'u32[144,128]{1,0:T(1,128)}', space=vmem, size = 0x12000, scoped, tag = 'internal scratch']
  %s0 = inlined_call_operand.hbm [shape: f32[2,64], index: 0, kind: input, shape index: {}]
  %s1 = inlined_call_operand.hbm [shape: bf16[64,128], index: 1, kind: input, shape index: {}]
  %s2 = inlined_call_operand.vmem [shape: f32[1,128], index: 2, kind: input, shape index: {}]
  %s3 = inlined_call_operand.hbm [shape: bf16[128,128], index: 3, kind: input, shape index: {}]
  %s4 = inlined_call_operand.vmem [shape: f32[1,128], index: 4, kind: input, shape index: {}]
  %s5 = inlined_call_operand.hbm [shape: bf16[128,128], index: 5, kind: input, shape index: {}]
  %s6 = inlined_call_operand.vmem [shape: f32[1,128], index: 6, kind: input, shape index: {}]
  %s7 = inlined_call_operand.hbm [shape: bf16[2,128], index: 7, kind: output, shape index: {}]
  %s8 = sld [smem:[#allocation0]]
  $region54: #{tpu_custom_call.1} parent=0
    _
  %s10 = ssub.s32 1, %s8
  %s11 = scalar_select 0, %s10, %s8
  $region1: #{tpu_custom_call.1} parent=0
    #allocation2 [shape = 'u8[1024]{0}', space=vmem, size = 0x400, scoped, tag = 'input window, operand 0, single buffered']
    #allocation3 [shape = 's32[1]{0}', space=sflag, size = 0x4, scoped, tag = 'scoped memory for tpu_custom_call.1']
    #allocation4 [shape = 's32[1]{0}', space=sflag, size = 0x4, scoped, tag = 'scoped memory for tpu_custom_call.1']
    #allocation5 [shape = 'u8[16384]{0}', space=vmem, size = 0x4000, scoped, tag = 'input window, operand 1, single buffered']
    #allocation6 [shape = 's32[1]{0}', space=sflag, size = 0x4, scoped, tag = 'scoped memory for tpu_custom_call.1']
    #allocation7 [shape = 'u8[32768]{0}', space=vmem, size = 0x8000, scoped, tag = 'input window, operand 3, single buffered']
    #allocation8 [shape = 'u8[32768]{0}', space=vmem, size = 0x8000, scoped, tag = 'input window, operand 5, single buffered']
    #allocation9 [shape = 's32[1]{0}', space=sflag, size = 0x4, scoped, tag = 'scoped memory for tpu_custom_call.1']
    #allocation10 [shape = 'u8[512]{0}', space=vmem, size = 0x400, scoped, tag = 'output window, operand 0, single buffered']
    %12 = vsyncpa [#allocation3], 0
    %13 = vsyncpa [#allocation6], 0
    %14 = vsyncpa [#allocation9], 0
    %15 = vsyncpa [#allocation4], 0
    // Predicated region
    $region2: #{tpu_custom_call.1} parent=1 // pred_check
      _
    $region3: #{tpu_custom_call.1} parent=1 // pred_check_branch
      %17 = sbr.rel (0) target = $region5
    $region4: #{tpu_custom_call.1} parent=1 // pred_region
      %s19 = ssub.s32 32, 32
      %20 = vsyncadd [#allocation3], %s19
      %s22 = sshll.u32 [#allocation2], 4
      %s23 = int_to_ptr.vmem [resolvable:$true] %s22
      %25 = dma.hbm_to_vmem [thread:$0]  %s0, 32, %s23, [#allocation3]
    $region5: #{tpu_custom_call.1} parent=1 // pred_fallthru
      _
    // Predicated region
    $region6: #{tpu_custom_call.1} parent=1 // pred_check
      _
    $region7: #{tpu_custom_call.1} parent=1 // pred_check_branch
      %27 = sbr.rel (0) target = $region9
    $region8: #{tpu_custom_call.1} parent=1 // pred_region
      %s29 = ssub.s32 512, 512
      %30 = vsyncadd [#allocation6], %s29
      %s31 = sshll.u32 [#allocation5], 4
      %s32 = int_to_ptr.vmem [resolvable:$true] %s31
      %37 = dma.hbm_to_vmem [thread:$0]  %s1, 512, %s32, [#allocation6], 64, 64, 4
    $region9: #{tpu_custom_call.1} parent=1 // pred_fallthru
      _
    // Predicated region
    $region10: #{tpu_custom_call.1} parent=1 // pred_check
      _
    $region11: #{tpu_custom_call.1} parent=1 // pred_check_branch
      %39 = sbr.rel (0) target = $region13
    $region12: #{tpu_custom_call.1} parent=1 // pred_region
      _
    $region13: #{tpu_custom_call.1} parent=1 // pred_fallthru
      _
    // Predicated region
    $region14: #{tpu_custom_call.1} parent=1 // pred_check
      _
    $region15: #{tpu_custom_call.1} parent=1 // pred_check_branch
      %41 = sbr.rel (0) target = $region17
    $region16: #{tpu_custom_call.1} parent=1 // pred_region
      %s43 = ssub.s32 1024, 1024
      %44 = vsyncadd [#allocation6], %s43
      %s45 = sshll.u32 [#allocation7], 4
      %s46 = int_to_ptr.vmem [resolvable:$true] %s45
      %51 = dma.hbm_to_vmem [thread:$0]  %s3, 1024, %s46, [#allocation6], 64, 64, 4
    $region17: #{tpu_custom_call.1} parent=1 // pred_fallthru
      _
    // Predicated region
    $region18: #{tpu_custom_call.1} parent=1 // pred_check
      _
    $region19: #{tpu_custom_call.1} parent=1 // pred_check_branch
      %53 = sbr.rel (0) target = $region21
    $region20: #{tpu_custom_call.1} parent=1 // pred_region
      _
    $region21: #{tpu_custom_call.1} parent=1 // pred_fallthru
      _
    // Predicated region
    $region22: #{tpu_custom_call.1} parent=1 // pred_check
      _
    $region23: #{tpu_custom_call.1} parent=1 // pred_check_branch
      %55 = sbr.rel (0) target = $region25
    $region24: #{tpu_custom_call.1} parent=1 // pred_region
      %s57 = ssub.s32 1024, 1024
      %58 = vsyncadd [#allocation9], %s57
      %s59 = sshll.u32 [#allocation8], 4
      %s60 = int_to_ptr.vmem [resolvable:$true] %s59
      %65 = dma.hbm_to_vmem [thread:$0]  %s5, 1024, %s60, [#allocation9], 64, 64, 4
    $region25: #{tpu_custom_call.1} parent=1 // pred_fallthru
      _
    // Predicated region
    $region26: #{tpu_custom_call.1} parent=1 // pred_check
      _
    $region27: #{tpu_custom_call.1} parent=1 // pred_check_branch
      %67 = sbr.rel (0) target = $region29
    $region28: #{tpu_custom_call.1} parent=1 // pred_region
      _
    $region29: #{tpu_custom_call.1} parent=1 // pred_fallthru
      _
    // Predicated region
    $region30: #{tpu_custom_call.1} parent=1 // pred_check
      _
    $region31: #{tpu_custom_call.1} parent=1 // pred_check_branch
      %69 = sbr.rel (0) target = $region33
    $region32: #{tpu_custom_call.1} parent=1 // pred_region
      %70 = dma.done [#allocation3], 32
    $region33: #{tpu_custom_call.1} parent=1 // pred_fallthru
      _
    // Predicated region
    $region34: #{tpu_custom_call.1} parent=1 // pred_check
      _
    $region35: #{tpu_custom_call.1} parent=1 // pred_check_branch
      %72 = sbr.rel (0) target = $region37
    $region36: #{tpu_custom_call.1} parent=1 // pred_region
      %73 = dma.done [#allocation6], 512
    $region37: #{tpu_custom_call.1} parent=1 // pred_fallthru
      _
    // Predicated region
    $region38: #{tpu_custom_call.1} parent=1 // pred_check
      _
    $region39: #{tpu_custom_call.1} parent=1 // pred_check_branch
      %75 = sbr.rel (0) target = $region41
    $region40: #{tpu_custom_call.1} parent=1 // pred_region
      %76 = dma.done [#allocation6], 1024
    $region41: #{tpu_custom_call.1} parent=1 // pred_fallthru
      _
    // Predicated region
    $region42: #{tpu_custom_call.1} parent=1 // pred_check
      _
    $region43: #{tpu_custom_call.1} parent=1 // pred_check_branch
      %78 = sbr.rel (0) target = $region45
    $region44: #{tpu_custom_call.1} parent=1 // pred_region
      %79 = dma.done [#allocation9], 1024
    $region45: #{tpu_custom_call.1} parent=1 // pred_fallthru
      _
    %v81 = vld [vmem:[#allocation2] sm:$0x3]
    %v82 = vpack.c.bf16 %v81, %v81
    %v83 = vld [vmem:[#allocation5] sm:$0xf]
    %v84 = vld [vmem:[#allocation5 + $0x4] sm:$0xf]
    %v85 = vld [vmem:[#allocation5 + $0x8] sm:$0xf]
    %v86 = vld [vmem:[#allocation5 + $0xc] sm:$0xf]
    %v87 = vld [vmem:[#allocation5 + $0x10] sm:$0xf]
    %v88 = vld [vmem:[#allocation5 + $0x14] sm:$0xf]
    %v89 = vld [vmem:[#allocation5 + $0x18] sm:$0xf]
    %v90 = vld [vmem:[#allocation5 + $0x1c] sm:$0xf]
    %v91 = vld [vmem:[%s2] sm:$0x1]
    %v93 = vlaneseq
    %v94 = vshrl.u32 %v93, 7
    %v95 = vsub.s32 0, %v94
    %v96 = vrot.slane %v91, %v95
    %v106 = vunpack.c.l.b16 %v83
    %v107 = vunpack.c.l.b16 %v84
    %v108 = vunpack.c.l.b16 %v85
    %v109 = vunpack.c.l.b16 %v86
    %v110 = vunpack.c.l.b16 %v87
    %v111 = vunpack.c.l.b16 %v88
    %v112 = vunpack.c.l.b16 %v89
    %v113 = vunpack.c.l.b16 %v90
    %v114 = vpack.c.b16 %v107, %v106
    %v115 = vpack.c.b16 %v109, %v108
    %v116 = vpack.c.b16 %v111, %v110
    %v117 = vpack.c.b16 %v113, %v112
    %vm122 = vcmask 523264
    %v124 = vsel %vm122, %v82, 0
    %126 = vmatprep.subr.bf16.mxu0 0
    %127 = vmatpush1.bf16.msra.mxu0 %v114
    %128 = vmatprep.subr.bf16.mxu0 0
    %129 = vmatpush1.bf16.msra.mxu0 %v115
    %130 = vmatprep.subr.bf16.mxu0 0
    %131 = vmatpush1.bf16.msra.mxu0 %v116
    %132 = vmatprep.subr.bf16.mxu0 0
    %133 = vmatpush1.bf16.msra.mxu0 %v117
    %134 = vmatprep.subr.bf16.mxu0 0
    %135 = vmatpush1.bf16.msra.mxu0 0
    %136 = vmatprep.subr.bf16.mxu0 0
    %137 = vmatpush1.bf16.msra.mxu0 0
    %138 = vmatprep.subr.bf16.mxu0 0
    %139 = vmatpush1.bf16.msra.mxu0 0
    %140 = vmatprep.subr.bf16.mxu0 0
    %141 = vmatpush1.bf16.msra.mxu0 0
    %142 = vmatprep.subr.bf16.mxu0 0
    %143 = vmatpush1.bf16.msra.mxu0 0
    %144 = vmatprep.subr.bf16.mxu0 0
    %145 = vmatpush1.bf16.msra.mxu0 0
    %146 = vmatprep.subr.bf16.mxu0 0
    %147 = vmatpush1.bf16.msra.mxu0 0
    %148 = vmatprep.subr.bf16.mxu0 0
    %149 = vmatpush1.bf16.msra.mxu0 0
    %150 = vmatprep.subr.bf16.mxu0 0
    %151 = vmatpush1.bf16.msra.mxu0 0
    %152 = vmatprep.subr.bf16.mxu0 0
    %153 = vmatpush1.bf16.msra.mxu0 0
    %154 = vmatprep.subr.bf16.mxu0 0
    %155 = vmatpush1.bf16.msra.mxu0 0
    %156 = vmatprep.subr.bf16.mxu0 0
    %157 = vmatpush1.bf16.msra.mxu0 0
    %158 = vmatprep.mubr.bf16.mxu0 0
    %159 = vmatmul.mubr.bf16.gmra.mrb[0].mxu0 %v124
    %v160 = vpop.f32.mrb[0].mxu0
    %v161 = vadd.f32 %v96, %v160
    %v162 = vpop.f32.mrb[0].mxu0
    %v163 = vpop.f32.mrb[0].mxu0
    %v164 = vpop.f32.mrb[0].mxu0
    %165 = vdwg.mxu0
    %v166 = vmax.f32 %v161, 0.0
    %v167 = vpack.c.bf16 %v166, %v166
    %v168 = vld [vmem:[#allocation7] sm:$0xf]
    %v169 = vld [vmem:[#allocation7 + $0x4] sm:$0xf]
    %v170 = vld [vmem:[#allocation7 + $0x8] sm:$0xf]
    %v171 = vld [vmem:[#allocation7 + $0xc] sm:$0xf]
    %v172 = vld [vmem:[#allocation7 + $0x10] sm:$0xf]
    %v173 = vld [vmem:[#allocation7 + $0x14] sm:$0xf]
    %v174 = vld [vmem:[#allocation7 + $0x18] sm:$0xf]
    %v175 = vld [vmem:[#allocation7 + $0x1c] sm:$0xf]
    %v176 = vld [vmem:[#allocation7 + $0x20] sm:$0xf]
    %v177 = vld [vmem:[#allocation7 + $0x24] sm:$0xf]
    %v178 = vld [vmem:[#allocation7 + $0x28] sm:$0xf]
    %v179 = vld [vmem:[#allocation7 + $0x2c] sm:$0xf]
    %v180 = vld [vmem:[#allocation7 + $0x30] sm:$0xf]
    %v181 = vld [vmem:[#allocation7 + $0x34] sm:$0xf]
    %v182 = vld [vmem:[#allocation7 + $0x38] sm:$0xf]
    %v183 = vld [vmem:[#allocation7 + $0x3c] sm:$0xf]
    %v184 = vld [vmem:[%s4] sm:$0x1]
    %v186 = vlaneseq
    %v187 = vshrl.u32 %v186, 7
    %v188 = vsub.s32 0, %v187
    %v189 = vrot.slane %v184, %v188
    %v207 = vunpack.c.l.b16 %v168
    %v208 = vunpack.c.l.b16 %v169
    %v209 = vunpack.c.l.b16 %v170
    %v210 = vunpack.c.l.b16 %v171
    %v211 = vunpack.c.l.b16 %v172
    %v212 = vunpack.c.l.b16 %v173
    %v213 = vunpack.c.l.b16 %v174
    %v214 = vunpack.c.l.b16 %v175
    %v215 = vunpack.c.l.b16 %v176
    %v216 = vunpack.c.l.b16 %v177
    %v217 = vunpack.c.l.b16 %v178
    %v218 = vunpack.c.l.b16 %v179
    %v219 = vunpack.c.l.b16 %v180
    %v220 = vunpack.c.l.b16 %v181
    %v221 = vunpack.c.l.b16 %v182
    %v222 = vunpack.c.l.b16 %v183
    %v223 = vpack.c.b16 %v208, %v207
    %v224 = vpack.c.b16 %v210, %v209
    %v225 = vpack.c.b16 %v212, %v211
    %v226 = vpack.c.b16 %v214, %v213
    %v227 = vpack.c.b16 %v216, %v215
    %v228 = vpack.c.b16 %v218, %v217
    %v229 = vpack.c.b16 %v220, %v219
    %v230 = vpack.c.b16 %v222, %v221
    %239 = vmatprep.subr.bf16.mxu0 0
    %240 = vmatpush1.bf16.msra.mxu0 %v223
    %241 = vmatprep.subr.bf16.mxu0 0
    %242 = vmatpush1.bf16.msra.mxu0 %v224
    %243 = vmatprep.subr.bf16.mxu0 0
    %244 = vmatpush1.bf16.msra.mxu0 %v225
    %245 = vmatprep.subr.bf16.mxu0 0
    %246 = vmatpush1.bf16.msra.mxu0 %v226
    %247 = vmatprep.subr.bf16.mxu0 0
    %248 = vmatpush1.bf16.msra.mxu0 %v227
    %249 = vmatprep.subr.bf16.mxu0 0
    %250 = vmatpush1.bf16.msra.mxu0 %v228
    %251 = vmatprep.subr.bf16.mxu0 0
    %252 = vmatpush1.bf16.msra.mxu0 %v229
    %253 = vmatprep.subr.bf16.mxu0 0
    %254 = vmatpush1.bf16.msra.mxu0 %v230
    %255 = vmatprep.subr.bf16.mxu0 0
    %256 = vmatpush1.bf16.msra.mxu0 0
    %257 = vmatprep.subr.bf16.mxu0 0
    %258 = vmatpush1.bf16.msra.mxu0 0
    %259 = vmatprep.subr.bf16.mxu0 0
    %260 = vmatpush1.bf16.msra.mxu0 0
    %261 = vmatprep.subr.bf16.mxu0 0
    %262 = vmatpush1.bf16.msra.mxu0 0
    %263 = vmatprep.subr.bf16.mxu0 0
    %264 = vmatpush1.bf16.msra.mxu0 0
    %265 = vmatprep.subr.bf16.mxu0 0
    %266 = vmatpush1.bf16.msra.mxu0 0
    %267 = vmatprep.subr.bf16.mxu0 0
    %268 = vmatpush1.bf16.msra.mxu0 0
    %269 = vmatprep.subr.bf16.mxu0 0
    %270 = vmatpush1.bf16.msra.mxu0 0
    %271 = vmatprep.mubr.bf16.mxu0 0
    %272 = vmatmul.mubr.bf16.gmra.mrb[0].mxu0 %v167
    %v273 = vpop.f32.mrb[0].mxu0
    %v274 = vadd.f32 %v189, %v273
    %v275 = vpop.f32.mrb[0].mxu0
    %v276 = vpop.f32.mrb[0].mxu0
    %v277 = vpop.f32.mrb[0].mxu0
    %278 = vdwg.mxu0
    %v279 = vmax.f32 %v274, 0.0
    %v280 = vpack.c.bf16 %v279, %v279
    %v281 = vld [vmem:[#allocation8] sm:$0xf]
    %v282 = vld [vmem:[#allocation8 + $0x4] sm:$0xf]
    %v283 = vld [vmem:[#allocation8 + $0x8] sm:$0xf]
    %v284 = vld [vmem:[#allocation8 + $0xc] sm:$0xf]
    %v285 = vld [vmem:[#allocation8 + $0x10] sm:$0xf]
    %v286 = vld [vmem:[#allocation8 + $0x14] sm:$0xf]
    %v287 = vld [vmem:[#allocation8 + $0x18] sm:$0xf]
    %v288 = vld [vmem:[#allocation8 + $0x1c] sm:$0xf]
    %v289 = vld [vmem:[#allocation8 + $0x20] sm:$0xf]
    %v290 = vld [vmem:[#allocation8 + $0x24] sm:$0xf]
    %v291 = vld [vmem:[#allocation8 + $0x28] sm:$0xf]
    %v292 = vld [vmem:[#allocation8 + $0x2c] sm:$0xf]
    %v293 = vld [vmem:[#allocation8 + $0x30] sm:$0xf]
    %v294 = vld [vmem:[#allocation8 + $0x34] sm:$0xf]
    %v295 = vld [vmem:[#allocation8 + $0x38] sm:$0xf]
    %v296 = vld [vmem:[#allocation8 + $0x3c] sm:$0xf]
    %v297 = vld [vmem:[%s6] sm:$0x1]
    %v299 = vlaneseq
    %v300 = vshrl.u32 %v299, 7
    %v301 = vsub.s32 0, %v300
    %v302 = vrot.slane %v297, %v301
    %v320 = vunpack.c.l.b16 %v281
    %v321 = vunpack.c.l.b16 %v282
    %v322 = vunpack.c.l.b16 %v283
    %v323 = vunpack.c.l.b16 %v284
    %v324 = vunpack.c.l.b16 %v285
    %v325 = vunpack.c.l.b16 %v286
    %v326 = vunpack.c.l.b16 %v287
    %v327 = vunpack.c.l.b16 %v288
    %v328 = vunpack.c.l.b16 %v289
    %v329 = vunpack.c.l.b16 %v290
    %v330 = vunpack.c.l.b16 %v291
    %v331 = vunpack.c.l.b16 %v292
    %v332 = vunpack.c.l.b16 %v293
    %v333 = vunpack.c.l.b16 %v294
    %v334 = vunpack.c.l.b16 %v295
    %v335 = vunpack.c.l.b16 %v296
    %v336 = vpack.c.b16 %v321, %v320
    %v337 = vpack.c.b16 %v323, %v322
    %v338 = vpack.c.b16 %v325, %v324
    %v339 = vpack.c.b16 %v327, %v326
    %v340 = vpack.c.b16 %v329, %v328
    %v341 = vpack.c.b16 %v331, %v330
    %v342 = vpack.c.b16 %v333, %v332
    %v343 = vpack.c.b16 %v335, %v334
    %352 = vmatprep.subr.bf16.mxu0 0
    %353 = vmatpush1.bf16.msra.mxu0 %v336
    %354 = vmatprep.subr.bf16.mxu0 0
    %355 = vmatpush1.bf16.msra.mxu0 %v337
    %356 = vmatprep.subr.bf16.mxu0 0
    %357 = vmatpush1.bf16.msra.mxu0 %v338
    %358 = vmatprep.subr.bf16.mxu0 0
    %359 = vmatpush1.bf16.msra.mxu0 %v339
    %360 = vmatprep.subr.bf16.mxu0 0
    %361 = vmatpush1.bf16.msra.mxu0 %v340
    %362 = vmatprep.subr.bf16.mxu0 0
    %363 = vmatpush1.bf16.msra.mxu0 %v341
    %364 = vmatprep.subr.bf16.mxu0 0
    %365 = vmatpush1.bf16.msra.mxu0 %v342
    %366 = vmatprep.subr.bf16.mxu0 0
    %367 = vmatpush1.bf16.msra.mxu0 %v343
    %368 = vmatprep.subr.bf16.mxu0 0
    %369 = vmatpush1.bf16.msra.mxu0 0
    %370 = vmatprep.subr.bf16.mxu0 0
    %371 = vmatpush1.bf16.msra.mxu0 0
    %372 = vmatprep.subr.bf16.mxu0 0
    %373 = vmatpush1.bf16.msra.mxu0 0
    %374 = vmatprep.subr.bf16.mxu0 0
    %375 = vmatpush1.bf16.msra.mxu0 0
    %376 = vmatprep.subr.bf16.mxu0 0
    %377 = vmatpush1.bf16.msra.mxu0 0
    %378 = vmatprep.subr.bf16.mxu0 0
    %379 = vmatpush1.bf16.msra.mxu0 0
    %380 = vmatprep.subr.bf16.mxu0 0
    %381 = vmatpush1.bf16.msra.mxu0 0
    %382 = vmatprep.subr.bf16.mxu0 0
    %383 = vmatpush1.bf16.msra.mxu0 0
    %384 = vmatprep.mubr.bf16.mxu0 0
    %385 = vmatmul.mubr.bf16.gmra.mrb[0].mxu0 %v280
    %v386 = vpop.f32.mrb[0].mxu0
    %v387 = vadd.f32 %v302, %v386
    %v388 = vpop.f32.mrb[0].mxu0
    %v389 = vpop.f32.mrb[0].mxu0
    %v390 = vpop.f32.mrb[0].mxu0
    %391 = vdwg.mxu0
    %v392 = vpack.c.bf16 %v387, %v387
    %393 = vst [vmem:[#allocation10] sm:$0x1] %v392
    // Predicated region
    $region46: #{tpu_custom_call.1} parent=1 // pred_check
      _
    $region47: #{tpu_custom_call.1} parent=1 // pred_check_branch
      %395 = sbr.rel (0) target = $region49
    $region48: #{tpu_custom_call.1} parent=1 // pred_region
      %s397 = ssub.s32 16, 16
      %398 = vsyncadd [#allocation4], %s397
      %s400 = sshll.u32 [#allocation10], 4
      %s401 = int_to_ptr.vmem [resolvable:$true] %s400
      %403 = dma.vmem_to_hbm [thread:$0]  %s401, 16, %s7, [#allocation4]
    $region49: #{tpu_custom_call.1} parent=1 // pred_fallthru
      _
    // Predicated region
    $region50: #{tpu_custom_call.1} parent=1 // pred_check
      _
    $region51: #{tpu_custom_call.1} parent=1 // pred_check_branch
      %405 = sbr.rel (0) target = $region53
    $region52: #{tpu_custom_call.1} parent=1 // pred_region
      %406 = dma.done [#allocation4], 16
    $region53: #{tpu_custom_call.1} parent=1 // pred_fallthru
      _
    %407 = vsyncpa [#allocation3], 1
    %408 = vsyncpa [#allocation6], 1
    %409 = vsyncpa [#allocation9], 1
    %410 = vsyncpa [#allocation4], 1

</llo_original>
